<compile_context>
chip_gen: v6e
topology: v6e:2x2x1
jax: 0.10.0
libtpu: 0.0.40
codegen_flags: <defaults>
</compile_context>

<pallas_src>
import functools

import jax
import jax.numpy as jnp
from jax.experimental import pallas as pl
from jax.experimental.pallas import tpu as pltpu


DFT_DTYPE = jnp.bfloat16   # basis matrices streamed from HBM in bf16


# ----------------------------------------------------------------------------
# DFT basis matrices (exact integer (n*n) mod L, then angle -> cos / -sin)
# ----------------------------------------------------------------------------
def make_dft_mats(L):
    n = jnp.arange(L, dtype=jnp.int32)
    prod_mod = (n[:, None] * n[None, :]) % L               # exact in int32
    theta = (2.0 * jnp.pi / L) * prod_mod.astype(jnp.float32)
    C = jnp.cos(theta).astype(DFT_DTYPE)                   # Re(exp(-i theta))
    S = (-jnp.sin(theta)).astype(DFT_DTYPE)                # Im(exp(-i theta))
    return C, S


def _pick_tile(L, prefer=None):
    for t in ((prefer,) if prefer else ()) + (512, 256, 128):
        if t is not None and t <= L and L % t == 0:
            return t
    return L


# ----------------------------------------------------------------------------
# Tiled DFT kernels (grid = (out-col tiles, reduction tiles); acc in VMEM)
# ----------------------------------------------------------------------------
def _dft_abs_kernel(x_ref, c_ref, s_ref, o_ref, accr, acci):
    k = pl.program_id(1)

    @pl.when(k == 0)
    def _():
        accr[...] = jnp.zeros_like(accr)
        acci[...] = jnp.zeros_like(acci)

    xb = x_ref[...].astype(DFT_DTYPE)
    accr[...] += jnp.dot(xb, c_ref[...], preferred_element_type=jnp.float32)
    acci[...] += jnp.dot(xb, s_ref[...], preferred_element_type=jnp.float32)

    @pl.when(k == pl.num_programs(1) - 1)
    def _():
        o_ref[...] = jnp.sqrt(accr[...] * accr[...] + acci[...] * acci[...])


def dft_abs(x, C, S, tile=None):
    """|fft(x, dim=-1)| via tiled DFT matmuls."""
    B, L = x.shape
    t = _pick_tile(L, tile)
    return pl.pallas_call(
        _dft_abs_kernel,
        out_shape=jax.ShapeDtypeStruct((B, L), jnp.float32),
        grid=(L // t, L // t),
        in_specs=[
            pl.BlockSpec((B, t), lambda n, k: (0, k)),     # x (reduction)
            pl.BlockSpec((t, t), lambda n, k: (k, n)),     # cos
            pl.BlockSpec((t, t), lambda n, k: (k, n)),     # -sin
        ],
        out_specs=pl.BlockSpec((B, t), lambda n, k: (0, n)),
        scratch_shapes=[pltpu.VMEM((B, t), jnp.float32),
                        pltpu.VMEM((B, t), jnp.float32)],
        compiler_params=pltpu.CompilerParams(
            dimension_semantics=("parallel", "arbitrary")),
    )(x, C, S)


def _dft_affine_kernel(x_ref, c_ref, s_ref, sc_ref, ar_ref, ai_ref,
                       or_ref, oi_ref, accr, acci):
    k = pl.program_id(1)

    @pl.when(k == 0)
    def _():
        accr[...] = jnp.zeros_like(accr)
        acci[...] = jnp.zeros_like(acci)

    xb = x_ref[...].astype(DFT_DTYPE)
    accr[...] += jnp.dot(xb, c_ref[...], preferred_element_type=jnp.float32)
    acci[...] += jnp.dot(xb, s_ref[...], preferred_element_type=jnp.float32)

    @pl.when(k == pl.num_programs(1) - 1)
    def _():
        sc = sc_ref[...]
        or_ref[...] = accr[...] * sc + ar_ref[...]
        oi_ref[...] = acci[...] * sc + ai_ref[...]


def dft_affine(x, C, S, scale, add_r, add_i, tile=None):
    """(Re, Im) of fft(x) * scale + (add_r + i*add_i), scale/add fused."""
    B, L = x.shape
    t = _pick_tile(L, tile)
    out = jax.ShapeDtypeStruct((B, L), jnp.float32)
    return pl.pallas_call(
        _dft_affine_kernel,
        out_shape=(out, out),
        grid=(L // t, L // t),
        in_specs=[
            pl.BlockSpec((B, t), lambda n, k: (0, k)),     # x (reduction)
            pl.BlockSpec((t, t), lambda n, k: (k, n)),     # cos
            pl.BlockSpec((t, t), lambda n, k: (k, n)),     # -sin
            pl.BlockSpec((B, t), lambda n, k: (0, n)),     # scale (out cols)
            pl.BlockSpec((B, t), lambda n, k: (0, n)),     # add_r
            pl.BlockSpec((B, t), lambda n, k: (0, n)),     # add_i
        ],
        out_specs=(pl.BlockSpec((B, t), lambda n, k: (0, n)),
                   pl.BlockSpec((B, t), lambda n, k: (0, n))),
        scratch_shapes=[pltpu.VMEM((B, t), jnp.float32),
                        pltpu.VMEM((B, t), jnp.float32)],
        compiler_params=pltpu.CompilerParams(
            dimension_semantics=("parallel", "arbitrary")),
    )(x, C, S, scale, add_r, add_i)


def _idft_real_kernel(yr_ref, yi_ref, m_ref, c_ref, s_ref, o_ref, acc, *, inv_l):
    k = pl.program_id(1)

    @pl.when(k == 0)
    def _():
        acc[...] = jnp.zeros_like(acc)

    m = m_ref[...]
    yr = (yr_ref[...] * m).astype(DFT_DTYPE)
    yi = (yi_ref[...] * m).astype(DFT_DTYPE)
    acc[...] += (jnp.dot(yr, c_ref[...], preferred_element_type=jnp.float32)
                 + jnp.dot(yi, s_ref[...], preferred_element_type=jnp.float32))

    @pl.when(k == pl.num_programs(1) - 1)
    def _():
        o_ref[...] = acc[...] * inv_l


def idft_real(yr, yi, mask, C, S, tile=None):
    """Re(ifft(mask * (yr + i*yi))).  Reuses the forward basis; 1/L in-kernel."""
    B, L = yr.shape
    t = _pick_tile(L, tile)
    kern = functools.partial(_idft_real_kernel, inv_l=1.0 / L)
    return pl.pallas_call(
        kern,
        out_shape=jax.ShapeDtypeStruct((B, L), jnp.float32),
        grid=(L // t, L // t),
        in_specs=[
            pl.BlockSpec((B, t), lambda n, k: (0, k)),     # yr (reduction)
            pl.BlockSpec((B, t), lambda n, k: (0, k)),     # yi
            pl.BlockSpec((B, t), lambda n, k: (0, k)),     # freq-domain mask
            pl.BlockSpec((t, t), lambda n, k: (k, n)),     # cos
            pl.BlockSpec((t, t), lambda n, k: (k, n)),     # -sin
        ],
        out_specs=pl.BlockSpec((B, t), lambda n, k: (0, n)),
        scratch_shapes=[pltpu.VMEM((B, t), jnp.float32)],
        compiler_params=pltpu.CompilerParams(
            dimension_semantics=("parallel", "arbitrary")),
    )(yr, yi, mask, C, S)


# ----------------------------------------------------------------------------
# SampMapGenerator FC chain — one fused kernel (weights resident in VMEM)
# ----------------------------------------------------------------------------
def _sampgen_fc_kernel(x_ref, w1_ref, b1_ref, g1_ref, be1_ref,
                       w2_ref, b2_ref, g2_ref, be2_ref,
                       w3_ref, b3_ref, o_ref):
    def bn_relu(h, g, be):
        # BatchNorm1d in train mode: biased batch statistics over the batch dim.
        mean = jnp.mean(h, axis=0, keepdims=True)
        var = jnp.mean((h - mean) ** 2, axis=0, keepdims=True)
        hn = (h - mean) * jax.lax.rsqrt(var + 1e-5) * g + be
        return jnp.maximum(hn, 0.0)

    h = jnp.dot(x_ref[...], w1_ref[...],
                preferred_element_type=jnp.float32) + b1_ref[...]
    h = bn_relu(h, g1_ref[...], be1_ref[...])
    h = jnp.dot(h, w2_ref[...],
                preferred_element_type=jnp.float32) + b2_ref[...]
    h = bn_relu(h, g2_ref[...], be2_ref[...])
    # Attention block elided: context layer maps M -> 1 and softmax over that
    # size-1 dim is identically 1.0, so x * attention_weights == x.
    h = jnp.dot(h, w3_ref[...],
                preferred_element_type=jnp.float32) + b3_ref[...]
    h = jnp.maximum(h, 0.0)
    mn = jnp.min(h, axis=-1, keepdims=True)
    mx = jnp.max(h, axis=-1, keepdims=True)
    o_ref[...] = (h - mn) / (mx - mn + 1e-8)


def sampgen_fc(p, xa):
    B = xa.shape[0]
    L = p["w3"].shape[1]
    return pl.pallas_call(
        _sampgen_fc_kernel,
        out_shape=jax.ShapeDtypeStruct((B, L), jnp.float32),
    )(xa, p["w1"], p["b1"], p["g1"], p["be1"],
      p["w2"], p["b2"], p["g2"], p["be2"], p["w3"], p["b3"])


def samp_map_generator(p, x_flat, C, S, tile):
    xa = dft_abs(x_flat, C, S, tile)          # |fft(x)|
    return sampgen_fc(p, xa)                  # fc1+bn+relu / fc2+bn+relu / fc3+minmax


# ----------------------------------------------------------------------------
# Conv1d ('same') — boundaries handled in-kernel (pltpu.roll + iota mask),
# grid over batch marked "parallel".  No HBM pad, no unaligned lane slices.
# ----------------------------------------------------------------------------
def _conv_body(xb, w_taps, K, pad):
    # xb: (Cin, L) f32, w_taps: (K, Cout, Cin).  Per-tap matmuls on rolled
    # copies; wraparound lanes are zeroed with an iota mask.
    Cin, L = xb.shape
    pos = jax.lax.broadcasted_iota(jnp.int32, (Cin, L), 1)
    acc = None
    for k in range(K):
        off = k - pad
        if off == 0:
            xs = xb
        else:
            xs = pltpu.roll(xb, shift=(-off) % L, axis=1)
            if off > 0:
                xs = jnp.where(pos >= L - off, 0.0, xs)
            else:
                xs = jnp.where(pos < -off, 0.0, xs)
        t = jnp.dot(w_taps[k], xs, preferred_element_type=jnp.float32)
        acc = t if acc is None else acc + t
    return acc


def conv1d(x, w, b, relu=False):
    # x: (B, Cin, L), w: (Cout, Cin, K), b: (Cout,)
    B, Cin, L = x.shape
    Cout, _, K = w.shape
    pad = (K - 1) // 2
    wt = jnp.transpose(w, (2, 0, 1))          # (K, Cout, Cin)
    b2 = b.reshape(Cout, 1)

    def kernel(x_ref, w_ref, b_ref, o_ref):
        acc = _conv_body(x_ref[0], w_ref[...], K, pad) + b_ref[...]
        if relu:
            acc = jnp.maximum(acc, 0.0)
        o_ref[0] = acc

    return pl.pallas_call(
        kernel,
        out_shape=jax.ShapeDtypeStruct((B, Cout, L), jnp.float32),
        grid=(B,),
        in_specs=[
            pl.BlockSpec((1, Cin, L), lambda i: (i, 0, 0)),
            pl.BlockSpec((K, Cout, Cin), lambda i: (0, 0, 0)),
            pl.BlockSpec((Cout, 1), lambda i: (0, 0)),
        ],
        out_specs=pl.BlockSpec((1, Cout, L), lambda i: (i, 0, 0)),
        compiler_params=pltpu.CompilerParams(
            dimension_semantics=("parallel",)),
    )(x, wt, b2)


def conv1d_cat(x_a, x_b, w, b, relu=False):
    """conv1d over channel-concat([x_a, x_b]) without materializing the concat
    (weights split per input; accumulation happens in VMEM)."""
    B, Ca, L = x_a.shape
    _, Cb, _ = x_b.shape
    Cout, _, K = w.shape
    pad = (K - 1) // 2
    wa = jnp.transpose(w[:, :Ca, :], (2, 0, 1))   # (K, Cout, Ca)
    wb = jnp.transpose(w[:, Ca:, :], (2, 0, 1))   # (K, Cout, Cb)
    b2 = b.reshape(Cout, 1)

    def kernel(a_ref, bx_ref, wa_ref, wb_ref, bias_ref, o_ref):
        acc = (_conv_body(a_ref[0], wa_ref[...], K, pad)
               + _conv_body(bx_ref[0], wb_ref[...], K, pad)
               + bias_ref[...])
        if relu:
            acc = jnp.maximum(acc, 0.0)
        o_ref[0] = acc

    return pl.pallas_call(
        kernel,
        out_shape=jax.ShapeDtypeStruct((B, Cout, L), jnp.float32),
        grid=(B,),
        in_specs=[
            pl.BlockSpec((1, Ca, L), lambda i: (i, 0, 0)),
            pl.BlockSpec((1, Cb, L), lambda i: (i, 0, 0)),
            pl.BlockSpec((K, Cout, Ca), lambda i: (0, 0, 0)),
            pl.BlockSpec((K, Cout, Cb), lambda i: (0, 0, 0)),
            pl.BlockSpec((Cout, 1), lambda i: (0, 0)),
        ],
        out_specs=pl.BlockSpec((1, Cout, L), lambda i: (i, 0, 0)),
        compiler_params=pltpu.CompilerParams(
            dimension_semantics=("parallel",)),
    )(x_a, x_b, wa, wb, b2)


# ----------------------------------------------------------------------------
# Minimal UNet1D (original UNet1D source not provided; assumed architecture).
# ----------------------------------------------------------------------------
def double_conv(p, x):
    x = conv1d(x, p["w1"], p["b1"], relu=True)
    x = conv1d(x, p["w2"], p["b2"], relu=True)
    return x


def maxpool1d(x):
    B, C, L = x.shape
    return jnp.max(x.reshape(B, C, L // 2, 2), axis=-1)


def unet_forward(p, x):
    # TODO(synk): UNet1D source not provided upstream; minimal 2-level 1-D
    # U-Net (DoubleConv / maxpool / nearest-upsample / skip-concat / 1x1 out).
    e1 = double_conv(p["enc1"], x)                         # (B,  8, L)
    e2 = double_conv(p["enc2"], maxpool1d(e1))             # (B, 16, L/2)
    up = jnp.repeat(e2, 2, axis=-1)                        # nearest x2 -> (B,16,L)
    # skip-concat fused into the first decoder conv via split weights.
    d = conv1d_cat(up, e1, p["dec1"]["w1"], p["dec1"]["b1"], relu=True)
    d = conv1d(d, p["dec1"]["w2"], p["dec1"]["b2"], relu=True)
    return conv1d(d, p["outw"], p["outb"], relu=False)     # (B, 1, L)


# ----------------------------------------------------------------------------
# Parameter initialisation (deterministic, synthetic weights)
# ----------------------------------------------------------------------------
def init_linear(key, din, dout):
    kw, kb = jax.random.split(key)
    w = jax.random.normal(kw, (din, dout), jnp.float32) / jnp.sqrt(float(din))
    b = jax.random.normal(kb, (1, dout), jnp.float32) * 0.01
    return w, b


def init_conv(key, cin, cout, k):
    kw, kb = jax.random.split(key)
    w = jax.random.normal(kw, (cout, cin, k), jnp.float32) / jnp.sqrt(float(cin * k))
    b = jax.random.normal(kb, (cout,), jnp.float32) * 0.01
    return w, b


def init_double_conv(key, cin, cmid):
    k1, k2 = jax.random.split(key)
    w1, b1 = init_conv(k1, cin, cmid, 3)
    w2, b2 = init_conv(k2, cmid, cmid, 3)
    return {"w1": w1, "b1": b1, "w2": w2, "b2": b2}


def init_unet(key, n_in_c, n_out_c):
    k1, k2, k3, k4 = jax.random.split(key, 4)
    p = {
        "enc1": init_double_conv(k1, n_in_c, 8),
        "enc2": init_double_conv(k2, 8, 16),
        "dec1": init_double_conv(k3, 16 + 8, 8),
    }
    p["outw"], p["outb"] = init_conv(k4, 8, n_out_c, 1)
    return p


def init_params(key, L, M, H1, iters, n_in_c=1):
    keys = jax.random.split(key, 3 + iters)
    sg = {}
    sg["w1"], sg["b1"] = init_linear(keys[0], L, H1)
    sg["g1"] = jnp.ones((1, H1), jnp.float32)
    sg["be1"] = jnp.zeros((1, H1), jnp.float32)
    sg["w2"], sg["b2"] = init_linear(keys[1], H1, M)
    sg["g2"] = jnp.ones((1, M), jnp.float32)
    sg["be2"] = jnp.zeros((1, M), jnp.float32)
    sg["w3"], sg["b3"] = init_linear(keys[2], M, L)
    # Attention params omitted: the block is a mathematical identity (see kernel).
    unets = [init_unet(keys[3 + i], n_in_c, n_in_c) for i in range(iters)]
    return {"sampgen": sg, "unets": unets, "dft": make_dft_mats(L),
            "M": M, "iters": iters}


# ----------------------------------------------------------------------------
# Forward pass (mirrors LSCSNet_base_1d.forward, default flags)
# ----------------------------------------------------------------------------
def lscsnet_forward(params, x, dft_tile=None):
    B, _, L = x.shape
    C, S = params["dft"]
    tile = _pick_tile(L, dft_tile)
    x_flat = x.reshape(B, L)

    samp = samp_map_generator(params["sampgen"], x_flat, C, S, tile)   # (B, L)

    # binary sampling map: top-M scatter (data-dependent -> plain JAX)
    # TODO(synk): top-k + scatter has no clean Pallas equivalent; done in JAX.
    _, idx = jax.lax.top_k(samp, params["M"])                          # (B, M)
    binary = jnp.zeros((B, L), jnp.float32).at[
        jnp.arange(B)[:, None], idx].set(1.0)                          # (B, L)

    zeros = jnp.zeros((B, L), jnp.float32)
    ones = jnp.ones((B, L), jnp.float32)
    yir, yii = dft_affine(x_flat, C, S, samp, zeros, zeros, tile)      # y_initial
    one_minus_samp = 1.0 - samp
    yr, yi = yir, yii

    for i in range(params["iters"]):
        xr = idft_real(yr, yi, ones, C, S, tile)                       # ifft(y).real
        x_unet = unet_forward(params["unets"][i], xr.reshape(B, 1, L))
        yr, yi = dft_affine(x_unet.reshape(B, L), C, S,
                            one_minus_samp, yir, yii, tile)            # fft*(1-s)+y0

    # final ifft with the binary mask fused into the kernel
    x_out = idft_real(yr, yi, binary, C, S, tile)
    return x_out.reshape(B, 1, L)


# ----------------------------------------------------------------------------
if __name__ == "__main__":
    key = jax.random.PRNGKey(0)
    B, L, M, H1, ITERS = 2, 256, 32, 64, 3     # small shapes (orig: L=6950, M=500)
    params = init_params(key, L, M, H1, ITERS, n_in_c=1)
    x = jax.random.normal(jax.random.fold_in(key, 123), (B, 1, L), jnp.float32)
    # dft_tile=128 -> 2x2 grid, exercising the tiled/accumulator DFT path.
    out = lscsnet_forward(params, x, dft_tile=128)
    jax.block_until_ready(out)
    assert out.shape == (B, 1, L)
    print("KERNEL_OK")
</pallas_src>

<mosaic_0001>
module attributes {stable_mosaic.version = 11 : i64} {
  func.func @_dft_abs_kernel(%arg0: i32, %arg1: i32, %arg2: memref<2x128xf32, #tpu.memory_space<vmem>>, %arg3: memref<128x128xbf16, #tpu.memory_space<vmem>>, %arg4: memref<128x128xbf16, #tpu.memory_space<vmem>>, %arg5: memref<2x128xf32, #tpu.memory_space<vmem>>, %arg6: memref<2x128xf32, #tpu.memory_space<vmem>>, %arg7: memref<2x128xf32, #tpu.memory_space<vmem>>) attributes {dimension_semantics = [#tpu.dimension_semantics<parallel>, #tpu.dimension_semantics<arbitrary>], iteration_bounds = array<i64: 2, 2>, scalar_prefetch = 0 : i64, scratch_operands = 2 : i64, tpu.core_type = #tpu.core_type<tc>, window_params = [{transform_indices = @transform_0, window_bounds = array<i64: 2, 128>}, {transform_indices = @transform_1, window_bounds = array<i64: 128, 128>}, {transform_indices = @transform_2, window_bounds = array<i64: 128, 128>}, {transform_indices = @transform_3, window_bounds = array<i64: 2, 128>}]} {
    %c0_i32 = arith.constant 0 : i32
    %0 = arith.cmpi eq, %arg1, %c0_i32 : i32
    %1 = arith.extui %0 : i1 to i32
    %c0_i32_0 = arith.constant 0 : i32
    %2 = arith.cmpi ne, %1, %c0_i32_0 : i32
    scf.if %2 {
      %cst_16 = arith.constant 0.000000e+00 : f32
      %18 = vector.broadcast %cst_16 : f32 to vector<2x128xf32>
      %c0_17 = arith.constant 0 : index
      %c0_18 = arith.constant 0 : index
      %19 = vector.load %arg6[%c0_17, %c0_18] : memref<2x128xf32, #tpu.memory_space<vmem>>, vector<2x128xf32>
      tpu.vector_store %arg6[%c0_17, %c0_18], %18 {strides = array<i32>} : memref<2x128xf32, #tpu.memory_space<vmem>>, vector<2x128xf32>,
      %cst_19 = arith.constant 0.000000e+00 : f32
      %20 = vector.broadcast %cst_19 : f32 to vector<2x128xf32>
      %c0_20 = arith.constant 0 : index
      %c0_21 = arith.constant 0 : index
      %21 = vector.load %arg7[%c0_20, %c0_21] : memref<2x128xf32, #tpu.memory_space<vmem>>, vector<2x128xf32>
      tpu.vector_store %arg7[%c0_20, %c0_21], %20 {strides = array<i32>} : memref<2x128xf32, #tpu.memory_space<vmem>>, vector<2x128xf32>,
    } else {
    }
    %c0 = arith.constant 0 : index
    %c0_1 = arith.constant 0 : index
    %3 = vector.load %arg2[%c0, %c0_1] : memref<2x128xf32, #tpu.memory_space<vmem>>, vector<2x128xf32>
    %4 = arith.truncf %3 : vector<2x128xf32> to vector<2x128xbf16>
    %c0_2 = arith.constant 0 : index
    %c0_3 = arith.constant 0 : index
    %5 = vector.load %arg6[%c0_2, %c0_3] : memref<2x128xf32, #tpu.memory_space<vmem>>, vector<2x128xf32>
    %c0_4 = arith.constant 0 : index
    %c0_5 = arith.constant 0 : index
    %6 = vector.load %arg3[%c0_4, %c0_5] : memref<128x128xbf16, #tpu.memory_space<vmem>>, vector<128x128xbf16>
    %cst = arith.constant dense<0.000000e+00> : vector<2x128xf32>
    %7 = tpu.matmul %4, %6, %cst {dimension_numbers = #tpu.dot_dimension_numbers<[1], [0], [0], [1], [0, 0, 1, 1], [], []>} : vector<2x128xbf16>, vector<128x128xbf16>, vector<2x128xf32> -> vector<2x128xf32>
    %8 = arith.addf %5, %7 : vector<2x128xf32>
    %c0_6 = arith.constant 0 : index
    %c0_7 = arith.constant 0 : index
    %9 = vector.load %arg6[%c0_6, %c0_7] : memref<2x128xf32, #tpu.memory_space<vmem>>, vector<2x128xf32>
    tpu.vector_store %arg6[%c0_6, %c0_7], %8 {strides = array<i32>} : memref<2x128xf32, #tpu.memory_space<vmem>>, vector<2x128xf32>,
    %c0_8 = arith.constant 0 : index
    %c0_9 = arith.constant 0 : index
    %10 = vector.load %arg7[%c0_8, %c0_9] : memref<2x128xf32, #tpu.memory_space<vmem>>, vector<2x128xf32>
    %c0_10 = arith.constant 0 : index
    %c0_11 = arith.constant 0 : index
    %11 = vector.load %arg4[%c0_10, %c0_11] : memref<128x128xbf16, #tpu.memory_space<vmem>>, vector<128x128xbf16>
    %cst_12 = arith.constant dense<0.000000e+00> : vector<2x128xf32>
    %12 = tpu.matmul %4, %11, %cst_12 {dimension_numbers = #tpu.dot_dimension_numbers<[1], [0], [0], [1], [0, 0, 1, 1], [], []>} : vector<2x128xbf16>, vector<128x128xbf16>, vector<2x128xf32> -> vector<2x128xf32>
    %13 = arith.addf %10, %12 : vector<2x128xf32>
    %c0_13 = arith.constant 0 : index
    %c0_14 = arith.constant 0 : index
    %14 = vector.load %arg7[%c0_13, %c0_14] : memref<2x128xf32, #tpu.memory_space<vmem>>, vector<2x128xf32>
    tpu.vector_store %arg7[%c0_13, %c0_14], %13 {strides = array<i32>} : memref<2x128xf32, #tpu.memory_space<vmem>>, vector<2x128xf32>,
    %c1_i32 = arith.constant 1 : i32
    %15 = arith.cmpi eq, %arg1, %c1_i32 : i32
    %16 = arith.extui %15 : i1 to i32
    %c0_i32_15 = arith.constant 0 : i32
    %17 = arith.cmpi ne, %16, %c0_i32_15 : i32
    scf.if %17 {
      %c0_16 = arith.constant 0 : index
      %c0_17 = arith.constant 0 : index
      %18 = vector.load %arg6[%c0_16, %c0_17] : memref<2x128xf32, #tpu.memory_space<vmem>>, vector<2x128xf32>
      %c0_18 = arith.constant 0 : index
      %c0_19 = arith.constant 0 : index
      %19 = vector.load %arg6[%c0_18, %c0_19] : memref<2x128xf32, #tpu.memory_space<vmem>>, vector<2x128xf32>
      %20 = arith.mulf %18, %19 : vector<2x128xf32>
      %c0_20 = arith.constant 0 : index
      %c0_21 = arith.constant 0 : index
      %21 = vector.load %arg7[%c0_20, %c0_21] : memref<2x128xf32, #tpu.memory_space<vmem>>, vector<2x128xf32>
      %c0_22 = arith.constant 0 : index
      %c0_23 = arith.constant 0 : index
      %22 = vector.load %arg7[%c0_22, %c0_23] : memref<2x128xf32, #tpu.memory_space<vmem>>, vector<2x128xf32>
      %23 = arith.mulf %21, %22 : vector<2x128xf32>
      %24 = arith.addf %20, %23 : vector<2x128xf32>
      %25 = math.sqrt %24 : vector<2x128xf32>
      %c0_24 = arith.constant 0 : index
      %c0_25 = arith.constant 0 : index
      %26 = vector.load %arg5[%c0_24, %c0_25] : memref<2x128xf32, #tpu.memory_space<vmem>>, vector<2x128xf32>
      tpu.vector_store %arg5[%c0_24, %c0_25], %25 {strides = array<i32>} : memref<2x128xf32, #tpu.memory_space<vmem>>, vector<2x128xf32>,
    } else {
    }
    return
  }
  func.func @transform_0(%arg0: i32, %arg1: i32) -> (i32, i32) {
    %c0_i32 = arith.constant 0 : i32
    %c0_i32_0 = arith.constant 0 : i32
    return %c0_i32, %arg1 : i32, i32
  }
  func.func @transform_1(%arg0: i32, %arg1: i32) -> (i32, i32) {
    %c0_i32 = arith.constant 0 : i32
    return %arg1, %arg0 : i32, i32
  }
  func.func @transform_2(%arg0: i32, %arg1: i32) -> (i32, i32) {
    %c0_i32 = arith.constant 0 : i32
    return %arg1, %arg0 : i32, i32
  }
  func.func @transform_3(%arg0: i32, %arg1: i32) -> (i32, i32) {
    %c0_i32 = arith.constant 0 : i32
    %c0_i32_0 = arith.constant 0 : i32
    return %c0_i32, %arg0 : i32, i32
  }
}

</mosaic_0001>

<llo_original>
// kernel: tpu_custom_call.1
$region0: #{tpu_custom_call.1}
  #allocation0 [shape = 'u32[]', space=smem, size = 0x4, offset = 0x4, fixed_abs, tag = 'smem constant byte address 0x4 - core index']
  #allocation1 [shape = 'u32[144,128]{1,0:T(1,128)}', space=vmem, size = 0x12000, scoped, tag = 'internal scratch']
  #allocation2 [shape = 'f32[2,128]{1,0:T(2,128)}', space=vmem, size = 0x400, scoped, tag = 'scratch operand']
  #allocation3 [shape = 'f32[2,128]{1,0:T(2,128)}', space=vmem, size = 0x400, scoped, tag = 'scratch operand']
  %s0 = inlined_call_operand.hbm [shape: f32[2,256], index: 0, kind: input, shape index: {}]
  %s1 = inlined_call_operand.hbm [shape: bf16[256,256], index: 1, kind: input, shape index: {}]
  %s2 = inlined_call_operand.hbm [shape: bf16[256,256], index: 2, kind: input, shape index: {}]
  %s3 = inlined_call_operand.hbm [shape: f32[2,256], index: 3, kind: output, shape index: {}]
  %s4 = sld [smem:[#allocation0]]
  $region65: #{tpu_custom_call.1} parent=0
    _
  %s6 = ssub.s32 1, %s4
  %s7 = scalar_select 0, %s6, %s4
  $region1: #{tpu_custom_call.1} parent=0
    #allocation4 [shape = 'u8[2048]{0}', space=vmem, size = 0x800, scoped, tag = 'input window, operand 0']
    #allocation5 [shape = 's32[2]{0}', space=sflag, size = 0x8, scoped, tag = 'scoped memory for tpu_custom_call.1']
    #allocation6 [shape = 's32[2]{0}', space=sflag, size = 0x8, scoped, tag = 'scoped memory for tpu_custom_call.1']
    #allocation7 [shape = 'u8[65536]{0}', space=vmem, size = 0x10000, scoped, tag = 'input window, operand 1']
    #allocation8 [shape = 's32[2]{0}', space=sflag, size = 0x8, scoped, tag = 'scoped memory for tpu_custom_call.1']
    #allocation9 [shape = 'u8[65536]{0}', space=vmem, size = 0x10000, scoped, tag = 'input window, operand 2']
    #allocation10 [shape = 'u8[2048]{0}', space=vmem, size = 0x800, scoped, tag = 'output window, operand 0']
    %8 = vsyncpa [#allocation5], 0
    %s9 = scalar_lea.sflag [#allocation5], 1
    %10 = vsyncpa %s9, 0
    %11 = vsyncpa [#allocation8], 0
    %s12 = scalar_lea.sflag [#allocation8], 1
    %13 = vsyncpa %s12, 0
    %14 = vsyncpa [#allocation6], 0
    %s15 = scalar_lea.sflag [#allocation6], 1
    %16 = vsyncpa %s15, 0
    loop: start=0, step=1, limit=6
    $region2: #{tpu_custom_call.1} parent=1 // loop_pre_header
      _
    $region3: #{tpu_custom_call.1} parent=1 // loop_header
      %s18 = sphi 0, %s22
      %p19 = scmp.ge.s32.totalorder %s18, 6
      %s25 = sphi 0, %s37
      %s26 = sphi 0, %s33
      %s27 = sphi 0, %s25
      %s28 = sphi 0, %s26
      %s29 = sphi 0, %s27
      %s30 = sphi 0, %s28
      %s40 = sphi 0, %s42
      %s43 = sphi 0, %s40
      %s44 = sphi 0, %s43
      %s60 = sphi 0, %s44
      %s68 = sphi 0, %s70
      %s71 = sphi 0, %s68
      %s72 = sphi 0, %s71
      %s88 = sphi 0, %s72
      %s96 = sphi 0, %s98
      %s99 = sphi 0, %s96
      %s100 = sphi 0, %s99
      %s116 = sphi 0, %s100
      %s122 = sphi 0, %s124
      %s125 = sphi 0, %s122
      %s126 = sphi 0, %s125
      %s142 = sphi 0, %s126
    $region4: #{tpu_custom_call.1} parent=1 // loop_header_branch
      %21 = sbr.rel (%p19) target = $region8
    $region5: #{tpu_custom_call.1} parent=1 // loop_body
      %s23 = ssub.s32 %s18, 1
      %s24 = ssub.s32 %s18, 2
      %s31 = sadd.s32 1, %s26
      %p32 = scmp.ge.s32.totalorder %s31, 2
      %s33 = scalar_select %p32, 0, %s31
      %s34 = sadd.s32 1, %s25
      %s35 = scalar_select %p32, %s34, %s25
      %p36 = scmp.ge.s32.totalorder %s35, 2
      %s37 = scalar_select %p36, 0, %s35
      %s38 = ssub.s32 %s26, %s33
      %p39 = scmp.eq.s32.totalorder %s38, 0
      %s41 = sadd.s32 %s40, 1
      %s42 = scalar_select %p39, %s40, %s41
      %p45 = pneg %p39
      %p46 = scmp.eq.s32.totalorder %s18, 3
      %p47 = por %p45, %p46
      %p48 = scmp.ne.s32.totalorder %s40, %s43
      %p49 = scmp.eq.s32.totalorder %s18, 0
      %p50 = por %p48, %p49
      %p51 = scmp.ne.s32.totalorder %s40, %s43
      %p52 = scmp.eq.s32.totalorder %s23, 3
      %p53 = por %p51, %p52
      %p54 = scmp.ne.s32.totalorder %s43, %s44
      %p55 = scmp.eq.s32.totalorder %s23, 0
      %p56 = por %p54, %p55
      %p57 = scmp.ne.s32.totalorder %s43, %s44
      %p58 = scmp.eq.s32.totalorder %s24, 3
      %p59 = por %p57, %p58
      %p61 = scmp.ne.s32.totalorder %s44, %s60
      %p62 = scmp.eq.s32.totalorder %s24, 0
      %p63 = por %p61, %p62
      %s64 = ssub.s32 %s26, %s33
      %s65 = ssub.s32 %s25, %s37
      %s66 = sor.u32 %s64, %s65
      %p67 = scmp.eq.s32.totalorder %s66, 0
      %s69 = sadd.s32 %s68, 1
      %s70 = scalar_select %p67, %s68, %s69
      %p73 = pneg %p67
      %p74 = scmp.eq.s32.totalorder %s18, 3
      %p75 = por %p73, %p74
      %p76 = scmp.ne.s32.totalorder %s68, %s71
      %p77 = scmp.eq.s32.totalorder %s18, 0
      %p78 = por %p76, %p77
      %p79 = scmp.ne.s32.totalorder %s68, %s71
      %p80 = scmp.eq.s32.totalorder %s23, 3
      %p81 = por %p79, %p80
      %p82 = scmp.ne.s32.totalorder %s71, %s72
      %p83 = scmp.eq.s32.totalorder %s23, 0
      %p84 = por %p82, %p83
      %p85 = scmp.ne.s32.totalorder %s71, %s72
      %p86 = scmp.eq.s32.totalorder %s24, 3
      %p87 = por %p85, %p86
      %p89 = scmp.ne.s32.totalorder %s72, %s88
      %p90 = scmp.eq.s32.totalorder %s24, 0
      %p91 = por %p89, %p90
      %s92 = ssub.s32 %s26, %s33
      %s93 = ssub.s32 %s25, %s37
      %s94 = sor.u32 %s92, %s93
      %p95 = scmp.eq.s32.totalorder %s94, 0
      %s97 = sadd.s32 %s96, 1
      %s98 = scalar_select %p95, %s96, %s97
      %p101 = pneg %p95
      %p102 = scmp.eq.s32.totalorder %s18, 3
      %p103 = por %p101, %p102
      %p104 = scmp.ne.s32.totalorder %s96, %s99
      %p105 = scmp.eq.s32.totalorder %s18, 0
      %p106 = por %p104, %p105
      %p107 = scmp.ne.s32.totalorder %s96, %s99
      %p108 = scmp.eq.s32.totalorder %s23, 3
      %p109 = por %p107, %p108
      %p110 = scmp.ne.s32.totalorder %s99, %s100
      %p111 = scmp.eq.s32.totalorder %s23, 0
      %p112 = por %p110, %p111
      %p113 = scmp.ne.s32.totalorder %s99, %s100
      %p114 = scmp.eq.s32.totalorder %s24, 3
      %p115 = por %p113, %p114
      %p117 = scmp.ne.s32.totalorder %s100, %s116
      %p118 = scmp.eq.s32.totalorder %s24, 0
      %p119 = por %p117, %p118
      %s120 = ssub.s32 %s25, %s37
      %p121 = scmp.eq.s32.totalorder %s120, 0
      %s123 = sadd.s32 %s122, 1
      %s124 = scalar_select %p121, %s122, %s123
      %p127 = pneg %p121
      %p128 = scmp.eq.s32.totalorder %s18, 3
      %p129 = por %p127, %p128
      %p130 = scmp.ne.s32.totalorder %s122, %s125
      %p131 = scmp.eq.s32.totalorder %s18, 0
      %p132 = por %p130, %p131
      %p133 = scmp.ne.s32.totalorder %s122, %s125
      %p134 = scmp.eq.s32.totalorder %s23, 3
      %p135 = por %p133, %p134
      %p136 = scmp.ne.s32.totalorder %s125, %s126
      %p137 = scmp.eq.s32.totalorder %s23, 0
      %p138 = por %p136, %p137
      %p139 = scmp.ne.s32.totalorder %s125, %s126
      %p140 = scmp.eq.s32.totalorder %s24, 3
      %p141 = por %p139, %p140
      %p143 = scmp.ne.s32.totalorder %s126, %s142
      %p144 = scmp.eq.s32.totalorder %s24, 0
      %p145 = por %p143, %p144
      %p146 = scmp.le.s32.totalorder 1, %s18
      %p147 = scmp.lt.s32.totalorder %s18, 5
      %p148 = pnand %p146, %p147
      %p149 = pneg %p148
      // Predicated region
      $region9: #{tpu_custom_call.1} parent=5 // pred_check
        _
      $region10: #{tpu_custom_call.1} parent=5 // pred_check_branch
        %151 = sbr.rel (%p148) target = $region12
      $region11: #{tpu_custom_call.1} parent=5 // pred_region
        %s152 = ssub.s32 %s18, 1
      $region12: #{tpu_custom_call.1} parent=5 // pred_fallthru
        _
      %p153 = scmp.lt.s32.totalorder %s18, 4
      // Predicated region
      $region13: #{tpu_custom_call.1} parent=5 // pred_check
        %p154 = pneg %p153
      $region14: #{tpu_custom_call.1} parent=5 // pred_check_branch
        %156 = sbr.rel (%p154) target = $region16
      $region15: #{tpu_custom_call.1} parent=5 // pred_region
        // Predicated region
        $region17: #{tpu_custom_call.1} parent=15 // pred_check
          %p157 = pneg %p50
        $region18: #{tpu_custom_call.1} parent=15 // pred_check_branch
          %159 = sbr.rel (%p157) target = $region20
        $region19: #{tpu_custom_call.1} parent=15 // pred_region
          %s160 = sand.u32 %s40, 1
          %s161 = scalar_lea.sflag [#allocation5], %s160
          %s162 = sand.u32 %s40, 1
          %s163 = smul.addr %s162, 2
          %s164 = scalar_lea.vmem [#allocation4], %s163
          %s166 = ssub.s32 32, 32
          %167 = vsyncadd %s161, %s166
          %s168 = smul.addr %s26, 32
          %s169 = scalar_lea.hbm %s0, %s168
          %s171 = sshll.u32 %s164, 4
          %s172 = int_to_ptr.vmem [resolvable:$true] %s171
          %174 = dma.hbm_to_vmem [thread:$0]  %s169, 32, %s172, %s161
        $region20: #{tpu_custom_call.1} parent=15 // pred_fallthru
          _
        // Predicated region
        $region21: #{tpu_custom_call.1} parent=15 // pred_check
          %p175 = pneg %p78
        $region22: #{tpu_custom_call.1} parent=15 // pred_check_branch
          %177 = sbr.rel (%p175) target = $region24
        $region23: #{tpu_custom_call.1} parent=15 // pred_region
          %s178 = sand.u32 %s18, 1
          %s179 = scalar_lea.sflag [#allocation8], %s178
          %s180 = sand.u32 %s68, 1
          %s181 = smul.addr %s180, 64
          %s182 = scalar_lea.vmem [#allocation7], %s181
          %s183 = smul.u32 16, %s26
          %s185 = ssub.s32 1024, 1024
          %186 = vsyncadd %s179, %s185
          %s187 = smul.addr %s183, 2
          %s188 = sadd.s32 %s25, %s187
          %s189 = smul.addr %s188, 64
          %s190 = scalar_lea.hbm %s1, %s189
          %s191 = sshll.u32 %s182, 4
          %s192 = int_to_ptr.vmem [resolvable:$true] %s191
          %197 = dma.hbm_to_vmem [thread:$0]  %s190, 1024, %s192, %s179, 128, 64, 4
        $region24: #{tpu_custom_call.1} parent=15 // pred_fallthru
          _
        // Predicated region
        $region25: #{tpu_custom_call.1} parent=15 // pred_check
          %p198 = pneg %p106
        $region26: #{tpu_custom_call.1} parent=15 // pred_check_branch
          %200 = sbr.rel (%p198) target = $region28
        $region27: #{tpu_custom_call.1} parent=15 // pred_region
          %s201 = sand.u32 %s18, 1
          %s202 = scalar_lea.sflag [#allocation8], %s201
          %s203 = sand.u32 %s96, 1
          %s204 = smul.addr %s203, 64
          %s205 = scalar_lea.vmem [#allocation9], %s204
          %s206 = smul.u32 16, %s26
          %s208 = ssub.s32 1024, 1024
          %209 = vsyncadd %s202, %s208
          %s210 = smul.addr %s206, 2
          %s211 = sadd.s32 %s25, %s210
          %s212 = smul.addr %s211, 64
          %s213 = scalar_lea.hbm %s2, %s212
          %s214 = sshll.u32 %s205, 4
          %s215 = int_to_ptr.vmem [resolvable:$true] %s214
          %220 = dma.hbm_to_vmem [thread:$0]  %s213, 1024, %s215, %s202, 128, 64, 4
        $region28: #{tpu_custom_call.1} parent=15 // pred_fallthru
          _
      $region16: #{tpu_custom_call.1} parent=5 // pred_fallthru
        _
      %p221 = scmp.le.s32.totalorder 1, %s18
      %p222 = scmp.lt.s32.totalorder %s18, 5
      %p223 = pnand %p221, %p222
      %p224 = pneg %p223
      // Predicated region
      $region29: #{tpu_custom_call.1} parent=5 // pred_check
        _
      $region30: #{tpu_custom_call.1} parent=5 // pred_check_branch
        %226 = sbr.rel (%p223) target = $region32
      $region31: #{tpu_custom_call.1} parent=5 // pred_region
        %s227 = ssub.s32 %s18, 1
        %s228 = sand.u32 %s43, 1
        %s229 = scalar_lea.sflag [#allocation5], %s228
        %s230 = sand.u32 %s43, 1
        %s231 = smul.addr %s230, 2
        %s232 = scalar_lea.vmem [#allocation4], %s231
        // Predicated region
        $region33: #{tpu_custom_call.1} parent=31 // pred_check
          %p233 = pneg %p56
        $region34: #{tpu_custom_call.1} parent=31 // pred_check_branch
          %235 = sbr.rel (%p233) target = $region36
        $region35: #{tpu_custom_call.1} parent=31 // pred_region
          %236 = dma.done %s229, 32
        $region36: #{tpu_custom_call.1} parent=31 // pred_fallthru
          _
        %s237 = sand.u32 %s23, 1
        %s238 = scalar_lea.sflag [#allocation8], %s237
        %s239 = sand.u32 %s71, 1
        %s240 = smul.addr %s239, 64
        %s241 = scalar_lea.vmem [#allocation7], %s240
        // Predicated region
        $region37: #{tpu_custom_call.1} parent=31 // pred_check
          %p242 = pneg %p84
        $region38: #{tpu_custom_call.1} parent=31 // pred_check_branch
          %244 = sbr.rel (%p242) target = $region40
        $region39: #{tpu_custom_call.1} parent=31 // pred_region
          %245 = dma.done %s238, 1024
        $region40: #{tpu_custom_call.1} parent=31 // pred_fallthru
          _
        %s246 = sand.u32 %s23, 1
        %s247 = scalar_lea.sflag [#allocation8], %s246
        %s248 = sand.u32 %s99, 1
        %s249 = smul.addr %s248, 64
        %s250 = scalar_lea.vmem [#allocation9], %s249
        // Predicated region
        $region41: #{tpu_custom_call.1} parent=31 // pred_check
          %p251 = pneg %p112
        $region42: #{tpu_custom_call.1} parent=31 // pred_check_branch
          %253 = sbr.rel (%p251) target = $region44
        $region43: #{tpu_custom_call.1} parent=31 // pred_region
          %254 = dma.done %s247, 1024
        $region44: #{tpu_custom_call.1} parent=31 // pred_fallthru
          _
        %s255 = sand.u32 %s43, 1
        %s256 = scalar_lea.sflag [#allocation5], %s255
        %s257 = sand.u32 %s43, 1
        %s258 = smul.addr %s257, 2
        %s259 = scalar_lea.vmem [#allocation4], %s258
        %p260 = pneg %p56
        %p261 = pneg %p53
        %s262 = sand.u32 %s23, 1
        %s263 = scalar_lea.sflag [#allocation8], %s262
        %s264 = sand.u32 %s71, 1
        %s265 = smul.addr %s264, 64
        %s266 = scalar_lea.vmem [#allocation7], %s265
        %p267 = pneg %p84
        %p268 = pneg %p81
        %s269 = sand.u32 %s23, 1
        %s270 = scalar_lea.sflag [#allocation8], %s269
        %s271 = sand.u32 %s99, 1
        %s272 = smul.addr %s271, 64
        %s273 = scalar_lea.vmem [#allocation9], %s272
        %p274 = pneg %p112
        %p275 = pneg %p109
        %p276 = pneg %p138
        %p277 = pneg %p135
        %s278 = sand.u32 %s125, 1
        %s279 = scalar_lea.sflag [#allocation6], %s278
        %s280 = sand.u32 %s125, 1
        %s281 = smul.addr %s280, 2
        %s282 = scalar_lea.vmem [#allocation10], %s281
        %s283 = smul.u32 16, %s28
        %s284 = smul.u32 16, %s28
        %p286 = scmp.eq.s32.totalorder %s28, 0
        // Predicated region
        $region45: #{tpu_custom_call.1} parent=31 // pred_check
          %p287 = pneg %p286
        $region46: #{tpu_custom_call.1} parent=31 // pred_check_branch
          %289 = sbr.rel (%p287) target = $region48
        $region47: #{tpu_custom_call.1} parent=31 // pred_region
          %290 = vst [vmem:[#allocation2] sm:$0x3] 0.0
          %291 = vst [vmem:[#allocation3] sm:$0x3] 0.0
        $region48: #{tpu_custom_call.1} parent=31 // pred_fallthru
          _
        %v292 = vld [vmem:[%s232] sm:$0x3]
        %v293 = vpack.c.bf16 %v292, %v292
        %v294 = vld [vmem:[#allocation2] sm:$0x3]
        %v295 = vld [vmem:[%s241] sm:$0xf]
        %v296 = vld [vmem:[%s241 + $0x4] sm:$0xf]
        %v297 = vld [vmem:[%s241 + $0x8] sm:$0xf]
        %v298 = vld [vmem:[%s241 + $0xc] sm:$0xf]
        %v299 = vld [vmem:[%s241 + $0x10] sm:$0xf]
        %v300 = vld [vmem:[%s241 + $0x14] sm:$0xf]
        %v301 = vld [vmem:[%s241 + $0x18] sm:$0xf]
        %v302 = vld [vmem:[%s241 + $0x1c] sm:$0xf]
        %v303 = vld [vmem:[%s241 + $0x20] sm:$0xf]
        %v304 = vld [vmem:[%s241 + $0x24] sm:$0xf]
        %v305 = vld [vmem:[%s241 + $0x28] sm:$0xf]
        %v306 = vld [vmem:[%s241 + $0x2c] sm:$0xf]
        %v307 = vld [vmem:[%s241 + $0x30] sm:$0xf]
        %v308 = vld [vmem:[%s241 + $0x34] sm:$0xf]
        %v309 = vld [vmem:[%s241 + $0x38] sm:$0xf]
        %v310 = vld [vmem:[%s241 + $0x3c] sm:$0xf]
        %v327 = vunpack.c.l.b16 %v295
        %v328 = vunpack.c.l.b16 %v296
        %v329 = vunpack.c.l.b16 %v297
        %v330 = vunpack.c.l.b16 %v298
        %v331 = vunpack.c.l.b16 %v299
        %v332 = vunpack.c.l.b16 %v300
        %v333 = vunpack.c.l.b16 %v301
        %v334 = vunpack.c.l.b16 %v302
        %v335 = vunpack.c.l.b16 %v303
        %v336 = vunpack.c.l.b16 %v304
        %v337 = vunpack.c.l.b16 %v305
        %v338 = vunpack.c.l.b16 %v306
        %v339 = vunpack.c.l.b16 %v307
        %v340 = vunpack.c.l.b16 %v308
        %v341 = vunpack.c.l.b16 %v309
        %v342 = vunpack.c.l.b16 %v310
        %v343 = vpack.c.b16 %v328, %v327
        %v344 = vpack.c.b16 %v330, %v329
        %v345 = vpack.c.b16 %v332, %v331
        %v346 = vpack.c.b16 %v334, %v333
        %v347 = vpack.c.b16 %v336, %v335
        %v348 = vpack.c.b16 %v338, %v337
        %v349 = vpack.c.b16 %v340, %v339
        %v350 = vpack.c.b16 %v342, %v341
        %359 = vmatprep.subr.bf16.mxu0 0
        %360 = vmatpush1.bf16.msra.mxu0 %v350
        %361 = vmatprep.subr.bf16.mxu0 0
        %362 = vmatpush1.bf16.msra.mxu0 %v349
        %363 = vmatprep.subr.bf16.mxu0 0
        %364 = vmatpush1.bf16.msra.mxu0 %v348
        %365 = vmatprep.subr.bf16.mxu0 0
        %366 = vmatpush1.bf16.msra.mxu0 %v347
        %367 = vmatprep.subr.bf16.mxu0 0
        %368 = vmatpush1.bf16.msra.mxu0 %v346
        %369 = vmatprep.subr.bf16.mxu0 0
        %370 = vmatpush1.bf16.msra.mxu0 %v345
        %371 = vmatprep.subr.bf16.mxu0 0
        %372 = vmatpush1.bf16.msra.mxu0 %v344
        %373 = vmatprep.subr.bf16.mxu0 0
        %374 = vmatpush1.bf16.msra.mxu0 %v343
        %375 = vmatprep.subr.bf16.mxu0 0
        %376 = vmatpush2.bf16.msra.mxu0 0
        %377 = vmatprep.subr.bf16.mxu0 0
        %378 = vmatpush2.bf16.msra.mxu0 0
        %379 = vmatprep.subr.bf16.mxu0 0
        %380 = vmatpush2.bf16.msra.mxu0 0
        %381 = vmatprep.subr.bf16.mxu0 0
        %382 = vmatpush2.bf16.msra.mxu0 0
        %383 = vmatprep.subr.bf16.mxu0 0
        %384 = vmatpush2.bf16.msra.mxu0 0
        %385 = vmatprep.subr.bf16.mxu0 0
        %386 = vmatpush2.bf16.msra.mxu0 0
        %387 = vmatprep.subr.bf16.mxu0 0
        %388 = vmatpush2.bf16.msra.mxu0 0
        %389 = vmatprep.subr.bf16.mxu0 0
        %390 = vmatpush2.bf16.msra.mxu0 0
        %391 = vmatprep.mubr.bf16.mxu0 0
        %392 = vmatmul.mubr.bf16.gmra.mxu0 %v293
        %v393 = vpop.f32.mrf.mxu0
        %v394 = vadd.f32 0.0, %v393
        %v395 = vpop.f32.mrf.mxu0
        %v396 = vpop.f32.mrf.mxu0
        %v397 = vpop.f32.mrf.mxu0
        %398 = vdwg.mxu0
        %v399 = vadd.f32 %v294, %v394
        %400 = vst [vmem:[#allocation2] sm:$0x3] %v399
        %v401 = vld [vmem:[#allocation3] sm:$0x3]
        %v402 = vld [vmem:[%s250] sm:$0xf]
        %v403 = vld [vmem:[%s250 + $0x4] sm:$0xf]
        %v404 = vld [vmem:[%s250 + $0x8] sm:$0xf]
        %v405 = vld [vmem:[%s250 + $0xc] sm:$0xf]
        %v406 = vld [vmem:[%s250 + $0x10] sm:$0xf]
        %v407 = vld [vmem:[%s250 + $0x14] sm:$0xf]
        %v408 = vld [vmem:[%s250 + $0x18] sm:$0xf]
        %v409 = vld [vmem:[%s250 + $0x1c] sm:$0xf]
        %v410 = vld [vmem:[%s250 + $0x20] sm:$0xf]
        %v411 = vld [vmem:[%s250 + $0x24] sm:$0xf]
        %v412 = vld [vmem:[%s250 + $0x28] sm:$0xf]
        %v413 = vld [vmem:[%s250 + $0x2c] sm:$0xf]
        %v414 = vld [vmem:[%s250 + $0x30] sm:$0xf]
        %v415 = vld [vmem:[%s250 + $0x34] sm:$0xf]
        %v416 = vld [vmem:[%s250 + $0x38] sm:$0xf]
        %v417 = vld [vmem:[%s250 + $0x3c] sm:$0xf]
        %v434 = vunpack.c.l.b16 %v402
        %v435 = vunpack.c.l.b16 %v403
        %v436 = vunpack.c.l.b16 %v404
        %v437 = vunpack.c.l.b16 %v405
        %v438 = vunpack.c.l.b16 %v406
        %v439 = vunpack.c.l.b16 %v407
        %v440 = vunpack.c.l.b16 %v408
        %v441 = vunpack.c.l.b16 %v409
        %v442 = vunpack.c.l.b16 %v410
        %v443 = vunpack.c.l.b16 %v411
        %v444 = vunpack.c.l.b16 %v412
        %v445 = vunpack.c.l.b16 %v413
        %v446 = vunpack.c.l.b16 %v414
        %v447 = vunpack.c.l.b16 %v415
        %v448 = vunpack.c.l.b16 %v416
        %v449 = vunpack.c.l.b16 %v417
        %v450 = vpack.c.b16 %v435, %v434
        %v451 = vpack.c.b16 %v437, %v436
        %v452 = vpack.c.b16 %v439, %v438
        %v453 = vpack.c.b16 %v441, %v440
        %v454 = vpack.c.b16 %v443, %v442
        %v455 = vpack.c.b16 %v445, %v444
        %v456 = vpack.c.b16 %v447, %v446
        %v457 = vpack.c.b16 %v449, %v448
        %466 = vmatprep.subr.bf16.mxu0 0
        %467 = vmatpush1.bf16.msra.mxu0 %v457
        %468 = vmatprep.subr.bf16.mxu0 0
        %469 = vmatpush1.bf16.msra.mxu0 %v456
        %470 = vmatprep.subr.bf16.mxu0 0
        %471 = vmatpush1.bf16.msra.mxu0 %v455
        %472 = vmatprep.subr.bf16.mxu0 0
        %473 = vmatpush1.bf16.msra.mxu0 %v454
        %474 = vmatprep.subr.bf16.mxu0 0
        %475 = vmatpush1.bf16.msra.mxu0 %v453
        %476 = vmatprep.subr.bf16.mxu0 0
        %477 = vmatpush1.bf16.msra.mxu0 %v452
        %478 = vmatprep.subr.bf16.mxu0 0
        %479 = vmatpush1.bf16.msra.mxu0 %v451
        %480 = vmatprep.subr.bf16.mxu0 0
        %481 = vmatpush1.bf16.msra.mxu0 %v450
        %482 = vmatprep.subr.bf16.mxu0 0
        %483 = vmatpush2.bf16.msra.mxu0 0
        %484 = vmatprep.subr.bf16.mxu0 0
        %485 = vmatpush2.bf16.msra.mxu0 0
        %486 = vmatprep.subr.bf16.mxu0 0
        %487 = vmatpush2.bf16.msra.mxu0 0
        %488 = vmatprep.subr.bf16.mxu0 0
        %489 = vmatpush2.bf16.msra.mxu0 0
        %490 = vmatprep.subr.bf16.mxu0 0
        %491 = vmatpush2.bf16.msra.mxu0 0
        %492 = vmatprep.subr.bf16.mxu0 0
        %493 = vmatpush2.bf16.msra.mxu0 0
        %494 = vmatprep.subr.bf16.mxu0 0
        %495 = vmatpush2.bf16.msra.mxu0 0
        %496 = vmatprep.subr.bf16.mxu0 0
        %497 = vmatpush2.bf16.msra.mxu0 0
        %498 = vmatprep.mubr.bf16.mxu0 0
        %499 = vmatmul.mubr.bf16.gmra.mxu0 %v293
        %v500 = vpop.f32.mrf.mxu0
        %v501 = vadd.f32 0.0, %v500
        %v502 = vpop.f32.mrf.mxu0
        %v503 = vpop.f32.mrf.mxu0
        %v504 = vpop.f32.mrf.mxu0
        %505 = vdwg.mxu0
        %v506 = vadd.f32 %v401, %v501
        %507 = vst [vmem:[#allocation3] sm:$0x3] %v506
        %p508 = scmp.eq.s32.totalorder %s28, 1
        // Predicated region
        $region49: #{tpu_custom_call.1} parent=31 // pred_check
          %p509 = pneg %p508
        $region50: #{tpu_custom_call.1} parent=31 // pred_check_branch
          %511 = sbr.rel (%p509) target = $region52
        $region51: #{tpu_custom_call.1} parent=31 // pred_region
          %v512 = vld [vmem:[#allocation2] sm:$0x3]
          %v513 = vmul.f32 %v512, %v512
          %v514 = vld [vmem:[#allocation3] sm:$0x3]
          %v515 = vmul.f32 %v514, %v514
          %v516 = vadd.f32 %v513, %v515
          %v517 = vrsqrt.pop %v516
          %v518 = vmul.f32 %v516, %v517
          %vm519 = vcmp.eq.f32.partialorder %v516, inf
          %v520 = vsel %vm519, %v516, %v518
          %vm521 = vcmp.eq.f32.partialorder %v516, 0.0
          %v522 = vand.u32 %v516, 2147483648
          %v523 = vsel %vm521, %v522, %v520
          %524 = vst [vmem:[%s282] sm:$0x3] %v523
        $region52: #{tpu_custom_call.1} parent=31 // pred_fallthru
          _
        %s525 = sand.u32 %s125, 1
        %s526 = scalar_lea.sflag [#allocation6], %s525
        %s527 = sand.u32 %s125, 1
        %s528 = smul.addr %s527, 2
        %s529 = scalar_lea.vmem [#allocation10], %s528
        // Predicated region
        $region53: #{tpu_custom_call.1} parent=31 // pred_check
          %p530 = pneg %p135
        $region54: #{tpu_custom_call.1} parent=31 // pred_check_branch
          %532 = sbr.rel (%p530) target = $region56
        $region55: #{tpu_custom_call.1} parent=31 // pred_region
          %s534 = ssub.s32 32, 32
          %535 = vsyncadd %s526, %s534
          %s536 = smul.addr %s27, 32
          %s537 = scalar_lea.hbm %s3, %s536
          %s539 = sshll.u32 %s529, 4
          %s540 = int_to_ptr.vmem [resolvable:$true] %s539
          %542 = dma.vmem_to_hbm [thread:$0]  %s540, 32, %s537, %s526
        $region56: #{tpu_custom_call.1} parent=31 // pred_fallthru
          _
      $region32: #{tpu_custom_call.1} parent=5 // pred_fallthru
        _
      %p543 = scmp.le.s32.totalorder 2, %s18
      // Predicated region
      $region57: #{tpu_custom_call.1} parent=5 // pred_check
        %p544 = pneg %p543
      $region58: #{tpu_custom_call.1} parent=5 // pred_check_branch
        %546 = sbr.rel (%p544) target = $region60
      $region59: #{tpu_custom_call.1} parent=5 // pred_region
        %s547 = ssub.s32 %s18, 2
        // Predicated region
        $region61: #{tpu_custom_call.1} parent=59 // pred_check
          %p548 = pneg %p141
        $region62: #{tpu_custom_call.1} parent=59 // pred_check_branch
          %550 = sbr.rel (%p548) target = $region64
        $region63: #{tpu_custom_call.1} parent=59 // pred_region
          %s551 = sand.u32 %s126, 1
          %s552 = scalar_lea.sflag [#allocation6], %s551
          %s553 = sand.u32 %s126, 1
          %s554 = smul.addr %s553, 2
          %s555 = scalar_lea.vmem [#allocation10], %s554
          %556 = dma.done %s552, 32
        $region64: #{tpu_custom_call.1} parent=59 // pred_fallthru
          _
      $region60: #{tpu_custom_call.1} parent=5 // pred_fallthru
        _
    $region6: #{tpu_custom_call.1} parent=1 // loop_footer
      %s22 = sadd.s32 1, %s18
    $region7: #{tpu_custom_call.1} parent=1 // loop_footer_branch
      %17 = sbr.rel target = $region3
    $region8: #{tpu_custom_call.1} parent=1 // loop_exit
      _
    %557 = vsyncpa [#allocation5], 1
    %s558 = scalar_lea.sflag [#allocation5], 1
    %559 = vsyncpa %s558, 1
    %560 = vsyncpa [#allocation8], 1
    %s561 = scalar_lea.sflag [#allocation8], 1
    %562 = vsyncpa %s561, 1
    %563 = vsyncpa [#allocation6], 1
    %s564 = scalar_lea.sflag [#allocation6], 1
    %565 = vsyncpa %s564, 1

</llo_original>
